<compile_context>
chip_gen: v6e
topology: v6e:2x2x1
jax: 0.10.0
libtpu: 0.0.40
codegen_flags: <defaults>
</compile_context>

<pallas_src>
import jax
import jax.numpy as jnp
from jax.experimental import pallas as pl
from jax.experimental.pallas import tpu as pltpu

BN_EPS = 1e-5
LANES = 128  # single full lane tile; H/2, H/4 and class_num must all be <= 128


def _round_up(n, m):
    return ((n + m - 1) // m) * m


def _bn_relu(h, gamma, beta):
    """Train-mode BatchNorm1d (biased variance, eps=1e-5) + ReLU, centered-form var.

    Pad columns (h == 0, gamma == 0, beta == 0) stay exactly 0.
    """
    mu = jnp.mean(h, axis=0, keepdims=True)
    d = h - mu
    var = jnp.mean(d * d, axis=0, keepdims=True)
    scale = gamma * jax.lax.rsqrt(var + BN_EPS)
    return jnp.maximum(d * scale + beta, 0.0)


def _domain_predictor_kernel(x_ref, slab_ref, o_ref):
    """One grid step = one independent (B, H) BatchNorm group.

    Slab row layout (bf16, 128 lanes, pads zero):
      [0 : H)                      w1^T   (H,   128)   lanes 0:H/2 real
      [W1R : W1R+128)              w2^T   (128, 128)   rows 0:H/2, lanes 0:H/4 real
      [W1R+128 : W1R+256)          w3^T   (128, 128)   rows 0:H/4, lanes 0:C real
      W1R+256 .. W1R+260           bn1 gamma, bn1 beta, bn2 gamma, bn2 beta, fc3 bias
    where W1R = round_up(H, 16).
    """
    H = x_ref.shape[2]
    w1_rows = _round_up(H, 16)          # must match pack_params
    w2_off = w1_rows
    w3_off = w1_rows + LANES
    v_off = w1_rows + 2 * LANES

    x = x_ref[0].astype(jnp.bfloat16)                              # (B, H)

    # ---- fc1 (bias dropped: cancels under train-mode BN) + BN1 + ReLU ----
    h1 = jnp.dot(x, slab_ref[0:H, :], preferred_element_type=jnp.float32)
    g1 = slab_ref[v_off + 0:v_off + 1, :].astype(jnp.float32)
    be1 = slab_ref[v_off + 1:v_off + 2, :].astype(jnp.float32)
    h1 = _bn_relu(h1, g1, be1)                                     # (B, 128) f32

    # ---- fc2 (bias dropped) + BN2 + ReLU ----
    h2 = jnp.dot(h1.astype(jnp.bfloat16), slab_ref[w2_off:w2_off + LANES, :],
                 preferred_element_type=jnp.float32)
    g2 = slab_ref[v_off + 2:v_off + 3, :].astype(jnp.float32)
    be2 = slab_ref[v_off + 3:v_off + 4, :].astype(jnp.float32)
    h2 = _bn_relu(h2, g2, be2)                                     # (B, 128) f32

    # ---- fc3: lane-dense padded matmul + bias row, one unmasked store ----
    b3 = slab_ref[v_off + 4:v_off + 5, :].astype(jnp.float32)
    y = jnp.dot(h2.astype(jnp.bfloat16), slab_ref[w3_off:w3_off + LANES, :],
                preferred_element_type=jnp.float32) + b3
    o_ref[0] = y                                                   # (B, 128); cols >= C are 0


def pack_params(params):
    """One-time packing (call OUTSIDE the per-step path).

    Pre-transposes fc weights to [in, out], zero-pads everything to 128 lanes, and packs
    weights + BN gamma/beta + fc3 bias into ONE bf16 slab so the kernel takes 2 inputs.
    fc1/fc2 biases are intentionally NOT packed (they cancel under train-mode BN).
    """
    w1 = jnp.asarray(params["w1"], jnp.float32)   # (H/2, H)   PyTorch (out, in)
    w2 = jnp.asarray(params["w2"], jnp.float32)   # (H/4, H/2)
    w3 = jnp.asarray(params["w3"], jnp.float32)   # (C,   H/4)
    H2, H = w1.shape
    H4 = w2.shape[0]
    C = w3.shape[0]
    assert H2 <= LANES and H4 <= LANES and C <= LANES, "single-tile packing needs dims <= 128"

    w1_rows = _round_up(H, 16)
    v_off = w1_rows + 2 * LANES
    rows = _round_up(v_off + 5, 16)

    slab = jnp.zeros((rows, LANES), jnp.float32)
    slab = slab.at[:H, :H2].set(w1.T)
    slab = slab.at[w1_rows:w1_rows + H2, :H4].set(w2.T)
    slab = slab.at[w1_rows + LANES:w1_rows + LANES + H4, :C].set(w3.T)
    slab = slab.at[v_off + 0, :H2].set(jnp.asarray(params["g1"], jnp.float32))
    slab = slab.at[v_off + 1, :H2].set(jnp.asarray(params["be1"], jnp.float32))
    slab = slab.at[v_off + 2, :H4].set(jnp.asarray(params["g2"], jnp.float32))
    slab = slab.at[v_off + 3, :H4].set(jnp.asarray(params["be2"], jnp.float32))
    slab = slab.at[v_off + 4, :C].set(jnp.asarray(params["b3"], jnp.float32))
    return {"slab": slab.astype(jnp.bfloat16), "class_num": int(C), "hidden": int(H)}


def domain_predictor_forward_groups(x_groups, packed):
    """x_groups: (G, B, H) f32 — G independent DomainPredictor forwards in one call."""
    G, B, H = x_groups.shape
    if B < 2:
        raise ValueError("train-mode BatchNorm1d requires batch size >= 2")
    C = packed["class_num"]
    slab = packed["slab"]
    R = slab.shape[0]

    flops = 2 * G * B * (H * (H // 2) + (H // 2) * (H // 4) + (H // 4) * C)
    bytes_accessed = x_groups.size * 4 + slab.size * 2 + G * B * LANES * 4

    out = pl.pallas_call(
        _domain_predictor_kernel,
        out_shape=jax.ShapeDtypeStruct((G, B, LANES), jnp.float32),
        grid_spec=pltpu.PrefetchScalarGridSpec(
            num_scalar_prefetch=0,
            grid=(G,),
            in_specs=[
                pl.BlockSpec((1, B, H), lambda g: (g, 0, 0)),
                pl.BlockSpec((R, LANES), lambda g: (0, 0)),   # constant block: fetched once
            ],
            out_specs=pl.BlockSpec((1, B, LANES), lambda g: (g, 0, 0)),
        ),
        compiler_params=pltpu.CompilerParams(dimension_semantics=("parallel",)),
        cost_estimate=pl.CostEstimate(
            flops=flops,
            transcendentals=G * (H // 2 + H // 4),   # rsqrt per BN column
            bytes_accessed=bytes_accessed,
        ),
    )(x_groups, slab)
    return out[:, :, :C]


def domain_predictor_forward(x, packed):
    """x: (B, hidden_size) float32. packed: output of pack_params(). Returns (B, C)."""
    return domain_predictor_forward_groups(x[None], packed)[0]


# ----------------------------- references & test harness -----------------------------

def _reference_forward(x, params):
    """Pure-JAX f32 reference matching PyTorch train-mode forward (with fc biases)."""
    def bn(h, g, be):
        mu = jnp.mean(h, axis=0, keepdims=True)
        var = jnp.mean((h - mu) ** 2, axis=0, keepdims=True)
        return (h - mu) * jax.lax.rsqrt(var + BN_EPS) * g + be

    h1 = jax.nn.relu(bn(x @ params["w1"].T + params["b1"], params["g1"], params["be1"]))
    h2 = jax.nn.relu(bn(h1 @ params["w2"].T + params["b2"], params["g2"], params["be2"]))
    return h2 @ params["w3"].T + params["b3"]


def _reference_forward_bf16(x, params):
    """Matched-precision reference: bf16 MXU operands / f32 accum, fc biases dropped —
    mirrors the kernel's arithmetic exactly (implementation-fidelity check)."""
    bf = lambda a: jnp.asarray(a, jnp.float32).astype(jnp.bfloat16)

    def bn(h, g, be):
        mu = jnp.mean(h, axis=0, keepdims=True)
        d = h - mu
        var = jnp.mean(d * d, axis=0, keepdims=True)
        return d * (g * jax.lax.rsqrt(var + BN_EPS)) + be

    g1 = bf(params["g1"]).astype(jnp.float32); be1 = bf(params["be1"]).astype(jnp.float32)
    g2 = bf(params["g2"]).astype(jnp.float32); be2 = bf(params["be2"]).astype(jnp.float32)
    b3 = bf(params["b3"]).astype(jnp.float32)

    h1 = jnp.dot(x.astype(jnp.bfloat16), bf(params["w1"]).T,
                 preferred_element_type=jnp.float32)
    h1 = jax.nn.relu(bn(h1, g1, be1))
    h2 = jnp.dot(h1.astype(jnp.bfloat16), bf(params["w2"]).T,
                 preferred_element_type=jnp.float32)
    h2 = jax.nn.relu(bn(h2, g2, be2))
    return jnp.dot(h2.astype(jnp.bfloat16), bf(params["w3"]).T,
                   preferred_element_type=jnp.float32) + b3


def make_params(key, hidden_size=64, class_num=2):
    h2, h4 = hidden_size // 2, hidden_size // 4
    ks = jax.random.split(key, 6)
    scale = 0.1
    return {
        # fc weights stored PyTorch-style: (out_features, in_features)
        "w1": scale * jax.random.normal(ks[0], (h2, hidden_size), jnp.float32),
        "b1": scale * jax.random.normal(ks[1], (h2,), jnp.float32),
        "w2": scale * jax.random.normal(ks[2], (h4, h2), jnp.float32),
        "b2": scale * jax.random.normal(ks[3], (h4,), jnp.float32),
        "w3": scale * jax.random.normal(ks[4], (class_num, h4), jnp.float32),
        "b3": scale * jax.random.normal(ks[5], (class_num,), jnp.float32),
        # BatchNorm1d default init: gamma=1, beta=0
        "g1": jnp.ones((h2,), jnp.float32),
        "be1": jnp.zeros((h2,), jnp.float32),
        "g2": jnp.ones((h4,), jnp.float32),
        "be2": jnp.zeros((h4,), jnp.float32),
    }


if __name__ == "__main__":
    hidden_size, class_num, batch = 64, 2, 8
    key = jax.random.PRNGKey(0)
    k_x, k_p, k_g = jax.random.split(key, 3)

    # x.view(x.size(0), -1) just flattens trailing dims; feed an already-flat (B, hidden) input.
    x = jax.random.normal(k_x, (batch, hidden_size), jnp.float32)
    params = make_params(k_p, hidden_size, class_num)

    packed = jax.block_until_ready(pack_params(params))   # one-time: transpose + pad + pack

    # --- single forward ---
    out = jax.block_until_ready(domain_predictor_forward(x, packed))
    assert out.shape == (batch, class_num)

    ref_matched = _reference_forward_bf16(x, params)       # same arithmetic as kernel
    ref_f32 = _reference_forward(x, params)                 # exact PyTorch train-mode semantics
    assert jnp.allclose(out, ref_matched, atol=5e-3, rtol=5e-3), \
        "mismatch vs. matched-precision (bf16-MXU) reference"
    assert jnp.allclose(out, ref_f32, atol=6e-2, rtol=5e-2), \
        "mismatch vs. pure-f32 reference beyond the bf16 precision trade"

    # --- multi-instance path: several independent BN groups amortized in one pallas_call ---
    G = 4
    xg = jax.random.normal(k_g, (G, batch, hidden_size), jnp.float32)
    outg = jax.block_until_ready(domain_predictor_forward_groups(xg, packed))
    refg = jnp.stack([_reference_forward_bf16(xg[i], params) for i in range(G)])
    assert outg.shape == (G, batch, class_num)
    assert jnp.allclose(outg, refg, atol=5e-3, rtol=5e-3), "mismatch on grid-batched path"

    print("KERNEL_OK")
</pallas_src>

<mosaic_0001>
module attributes {stable_mosaic.version = 11 : i64} {
  func.func @_domain_predictor_kernel(%arg0: i32, %arg1: memref<1x8x64xf32, #tpu.memory_space<vmem>>, %arg2: memref<336x128xbf16, #tpu.memory_space<vmem>>, %arg3: memref<1x8x128xf32, #tpu.memory_space<vmem>>) attributes {dimension_semantics = [#tpu.dimension_semantics<parallel>], iteration_bounds = array<i64: 1>, scalar_prefetch = 0 : i64, scratch_operands = 0 : i64, tpu.core_type = #tpu.core_type<tc>, window_params = [{transform_indices = @transform_0, window_bounds = array<i64: 1, 8, 64>}, {pipeline_mode = #tpu.pipeline_mode<synchronous>, transform_indices = @transform_1, window_bounds = array<i64: 336, 128>}, {transform_indices = @transform_2, window_bounds = array<i64: 1, 8, 128>}]} {
    %c0 = arith.constant 0 : index
    %c0_0 = arith.constant 0 : index
    %c0_1 = arith.constant 0 : index
    %0 = vector.load %arg1[%c0, %c0_0, %c0_1] : memref<1x8x64xf32, #tpu.memory_space<vmem>>, vector<1x8x64xf32>
    %1 = vector.shape_cast %0 : vector<1x8x64xf32> to vector<8x64xf32>
    %2 = arith.truncf %1 : vector<8x64xf32> to vector<8x64xbf16>
    %c0_2 = arith.constant 0 : index
    %c0_3 = arith.constant 0 : index
    %3 = vector.load %arg2[%c0_2, %c0_3] : memref<336x128xbf16, #tpu.memory_space<vmem>>, vector<64x128xbf16>
    %cst = arith.constant dense<0.000000e+00> : vector<8x128xf32>
    %4 = tpu.matmul %2, %3, %cst {dimension_numbers = #tpu.dot_dimension_numbers<[1], [0], [0], [1], [0, 0, 1, 1], [], []>} : vector<8x64xbf16>, vector<64x128xbf16>, vector<8x128xf32> -> vector<8x128xf32>
    %c320 = arith.constant 320 : index
    %c0_4 = arith.constant 0 : index
    %5 = vector.load %arg2[%c320, %c0_4] : memref<336x128xbf16, #tpu.memory_space<vmem>>, vector<1x128xbf16>
    %6 = arith.extf %5 : vector<1x128xbf16> to vector<1x128xf32>
    %c321 = arith.constant 321 : index
    %c0_5 = arith.constant 0 : index
    %7 = vector.load %arg2[%c321, %c0_5] : memref<336x128xbf16, #tpu.memory_space<vmem>>, vector<1x128xbf16>
    %8 = arith.extf %7 : vector<1x128xbf16> to vector<1x128xf32>
    %cst_6 = arith.constant dense<0.000000e+00> : vector<128xf32>
    %9 = vector.multi_reduction <add>, %4, %cst_6 [0] : vector<8x128xf32> to vector<128xf32>
    %10 = vector.shape_cast %9 : vector<128xf32> to vector<1x128xf32>
    %cst_7 = arith.constant 8.000000e+00 : f32
    %11 = vector.broadcast %cst_7 : f32 to vector<1x128xf32>
    %12 = arith.divf %10, %11 : vector<1x128xf32>
    %13 = vector.broadcast %12 : vector<1x128xf32> to vector<8x128xf32>
    %14 = arith.subf %4, %13 : vector<8x128xf32>
    %15 = arith.mulf %14, %14 : vector<8x128xf32>
    %cst_8 = arith.constant dense<0.000000e+00> : vector<128xf32>
    %16 = vector.multi_reduction <add>, %15, %cst_8 [0] : vector<8x128xf32> to vector<128xf32>
    %17 = vector.shape_cast %16 : vector<128xf32> to vector<1x128xf32>
    %cst_9 = arith.constant 8.000000e+00 : f32
    %18 = vector.broadcast %cst_9 : f32 to vector<1x128xf32>
    %19 = arith.divf %17, %18 : vector<1x128xf32>
    %cst_10 = arith.constant 9.99999974E-6 : f32
    %20 = vector.broadcast %cst_10 : f32 to vector<1x128xf32>
    %21 = arith.addf %19, %20 : vector<1x128xf32>
    %22 = math.rsqrt %21 : vector<1x128xf32>
    %23 = arith.mulf %6, %22 : vector<1x128xf32>
    %24 = vector.broadcast %23 : vector<1x128xf32> to vector<8x128xf32>
    %25 = arith.mulf %14, %24 : vector<8x128xf32>
    %26 = vector.broadcast %8 : vector<1x128xf32> to vector<8x128xf32>
    %27 = arith.addf %25, %26 : vector<8x128xf32>
    %cst_11 = arith.constant 0.000000e+00 : f32
    %28 = vector.broadcast %cst_11 : f32 to vector<8x128xf32>
    %29 = arith.maximumf %27, %28 : vector<8x128xf32>
    %30 = arith.truncf %29 : vector<8x128xf32> to vector<8x128xbf16>
    %c64 = arith.constant 64 : index
    %c0_12 = arith.constant 0 : index
    %31 = vector.load %arg2[%c64, %c0_12] : memref<336x128xbf16, #tpu.memory_space<vmem>>, vector<128x128xbf16>
    %cst_13 = arith.constant dense<0.000000e+00> : vector<8x128xf32>
    %32 = tpu.matmul %30, %31, %cst_13 {dimension_numbers = #tpu.dot_dimension_numbers<[1], [0], [0], [1], [0, 0, 1, 1], [], []>} : vector<8x128xbf16>, vector<128x128xbf16>, vector<8x128xf32> -> vector<8x128xf32>
    %c322 = arith.constant 322 : index
    %c0_14 = arith.constant 0 : index
    %33 = vector.load %arg2[%c322, %c0_14] : memref<336x128xbf16, #tpu.memory_space<vmem>>, vector<1x128xbf16>
    %34 = arith.extf %33 : vector<1x128xbf16> to vector<1x128xf32>
    %c323 = arith.constant 323 : index
    %c0_15 = arith.constant 0 : index
    %35 = vector.load %arg2[%c323, %c0_15] : memref<336x128xbf16, #tpu.memory_space<vmem>>, vector<1x128xbf16>
    %36 = arith.extf %35 : vector<1x128xbf16> to vector<1x128xf32>
    %cst_16 = arith.constant dense<0.000000e+00> : vector<128xf32>
    %37 = vector.multi_reduction <add>, %32, %cst_16 [0] : vector<8x128xf32> to vector<128xf32>
    %38 = vector.shape_cast %37 : vector<128xf32> to vector<1x128xf32>
    %cst_17 = arith.constant 8.000000e+00 : f32
    %39 = vector.broadcast %cst_17 : f32 to vector<1x128xf32>
    %40 = arith.divf %38, %39 : vector<1x128xf32>
    %41 = vector.broadcast %40 : vector<1x128xf32> to vector<8x128xf32>
    %42 = arith.subf %32, %41 : vector<8x128xf32>
    %43 = arith.mulf %42, %42 : vector<8x128xf32>
    %cst_18 = arith.constant dense<0.000000e+00> : vector<128xf32>
    %44 = vector.multi_reduction <add>, %43, %cst_18 [0] : vector<8x128xf32> to vector<128xf32>
    %45 = vector.shape_cast %44 : vector<128xf32> to vector<1x128xf32>
    %cst_19 = arith.constant 8.000000e+00 : f32
    %46 = vector.broadcast %cst_19 : f32 to vector<1x128xf32>
    %47 = arith.divf %45, %46 : vector<1x128xf32>
    %cst_20 = arith.constant 9.99999974E-6 : f32
    %48 = vector.broadcast %cst_20 : f32 to vector<1x128xf32>
    %49 = arith.addf %47, %48 : vector<1x128xf32>
    %50 = math.rsqrt %49 : vector<1x128xf32>
    %51 = arith.mulf %34, %50 : vector<1x128xf32>
    %52 = vector.broadcast %51 : vector<1x128xf32> to vector<8x128xf32>
    %53 = arith.mulf %42, %52 : vector<8x128xf32>
    %54 = vector.broadcast %36 : vector<1x128xf32> to vector<8x128xf32>
    %55 = arith.addf %53, %54 : vector<8x128xf32>
    %cst_21 = arith.constant 0.000000e+00 : f32
    %56 = vector.broadcast %cst_21 : f32 to vector<8x128xf32>
    %57 = arith.maximumf %55, %56 : vector<8x128xf32>
    %c324 = arith.constant 324 : index
    %c0_22 = arith.constant 0 : index
    %58 = vector.load %arg2[%c324, %c0_22] : memref<336x128xbf16, #tpu.memory_space<vmem>>, vector<1x128xbf16>
    %59 = arith.extf %58 : vector<1x128xbf16> to vector<1x128xf32>
    %60 = arith.truncf %57 : vector<8x128xf32> to vector<8x128xbf16>
    %c192 = arith.constant 192 : index
    %c0_23 = arith.constant 0 : index
    %61 = vector.load %arg2[%c192, %c0_23] : memref<336x128xbf16, #tpu.memory_space<vmem>>, vector<128x128xbf16>
    %cst_24 = arith.constant dense<0.000000e+00> : vector<8x128xf32>
    %62 = tpu.matmul %60, %61, %cst_24 {dimension_numbers = #tpu.dot_dimension_numbers<[1], [0], [0], [1], [0, 0, 1, 1], [], []>} : vector<8x128xbf16>, vector<128x128xbf16>, vector<8x128xf32> -> vector<8x128xf32>
    %63 = vector.broadcast %59 : vector<1x128xf32> to vector<8x128xf32>
    %64 = arith.addf %62, %63 : vector<8x128xf32>
    %c0_25 = arith.constant 0 : index
    %c0_26 = arith.constant 0 : index
    %c0_27 = arith.constant 0 : index
    %65 = vector.load %arg3[%c0_25, %c0_26, %c0_27] : memref<1x8x128xf32, #tpu.memory_space<vmem>>, vector<1x8x128xf32>
    %66 = vector.shape_cast %65 : vector<1x8x128xf32> to vector<8x128xf32>
    %67 = vector.shape_cast %64 : vector<8x128xf32> to vector<1x8x128xf32>
    tpu.vector_store %arg3[%c0_25, %c0_26, %c0_27], %67 {strides = array<i32>} : memref<1x8x128xf32, #tpu.memory_space<vmem>>, vector<1x8x128xf32>,
    return
  }
  func.func @transform_0(%arg0: i32) -> (i32, i32, i32) {
    %c0_i32 = arith.constant 0 : i32
    %c0_i32_0 = arith.constant 0 : i32
    %c0_i32_1 = arith.constant 0 : i32
    return %arg0, %c0_i32, %c0_i32_0 : i32, i32, i32
  }
  func.func @transform_1(%arg0: i32) -> (i32, i32) {
    %c0_i32 = arith.constant 0 : i32
    %c0_i32_0 = arith.constant 0 : i32
    %c0_i32_1 = arith.constant 0 : i32
    return %c0_i32, %c0_i32_0 : i32, i32
  }
  func.func @transform_2(%arg0: i32) -> (i32, i32, i32) {
    %c0_i32 = arith.constant 0 : i32
    %c0_i32_0 = arith.constant 0 : i32
    %c0_i32_1 = arith.constant 0 : i32
    return %arg0, %c0_i32, %c0_i32_0 : i32, i32, i32
  }
}

</mosaic_0001>

<llo_original>
// kernel: tpu_custom_call.1
$region0: #{tpu_custom_call.1}
  #allocation0 [shape = 'u32[]', space=smem, size = 0x4, offset = 0x4, fixed_abs, tag = 'smem constant byte address 0x4 - core index']
  #allocation1 [shape = 'u32[144,128]{1,0:T(1,128)}', space=vmem, size = 0x12000, scoped, tag = 'internal scratch']
  %s0 = inlined_call_operand.hbm [shape: f32[1,8,64], index: 0, kind: input, shape index: {}]
  %s1 = inlined_call_operand.hbm [shape: bf16[336,128], index: 1, kind: input, shape index: {}]
  %s2 = inlined_call_operand.hbm [shape: f32[1,8,128], index: 2, kind: output, shape index: {}]
  %s3 = sld [smem:[#allocation0]]
  $region26: #{tpu_custom_call.1} parent=0
    _
  %s5 = ssub.s32 1, %s3
  %s6 = scalar_select 0, %s5, %s3
  $region1: #{tpu_custom_call.1} parent=0
    #allocation2 [shape = 'u8[4096]{0}', space=vmem, size = 0x1000, scoped, tag = 'input window, operand 0, single buffered']
    #allocation3 [shape = 's32[1]{0}', space=sflag, size = 0x4, scoped, tag = 'scoped memory for tpu_custom_call.1']
    #allocation4 [shape = 's32[1]{0}', space=sflag, size = 0x4, scoped, tag = 'scoped memory for tpu_custom_call.1']
    #allocation5 [shape = 'u8[86016]{0}', space=vmem, size = 0x15000, scoped, tag = 'input window, operand 1, single buffered']
    #allocation6 [shape = 's32[1]{0}', space=sflag, size = 0x4, scoped, tag = 'scoped memory for tpu_custom_call.1']
    #allocation7 [shape = 'u8[4096]{0}', space=vmem, size = 0x1000, scoped, tag = 'output window, operand 0, single buffered']
    %7 = vsyncpa [#allocation3], 0
    %8 = vsyncpa [#allocation6], 0
    %9 = vsyncpa [#allocation4], 0
    // Predicated region
    $region2: #{tpu_custom_call.1} parent=1 // pred_check
      _
    $region3: #{tpu_custom_call.1} parent=1 // pred_check_branch
      %11 = sbr.rel (0) target = $region5
    $region4: #{tpu_custom_call.1} parent=1 // pred_region
      %s13 = ssub.s32 128, 128
      %14 = vsyncadd [#allocation3], %s13
      %s16 = sshll.u32 [#allocation2], 4
      %s17 = int_to_ptr.vmem [resolvable:$true] %s16
      %19 = dma.hbm_to_vmem [thread:$0]  %s0, 128, %s17, [#allocation3]
    $region5: #{tpu_custom_call.1} parent=1 // pred_fallthru
      _
    // Predicated region
    $region6: #{tpu_custom_call.1} parent=1 // pred_check
      _
    $region7: #{tpu_custom_call.1} parent=1 // pred_check_branch
      %21 = sbr.rel (0) target = $region9
    $region8: #{tpu_custom_call.1} parent=1 // pred_region
      %s23 = ssub.s32 2688, 2688
      %24 = vsyncadd [#allocation6], %s23
      %s25 = sshll.u32 [#allocation5], 4
      %s26 = int_to_ptr.vmem [resolvable:$true] %s25
      %31 = dma.hbm_to_vmem [thread:$0]  %s1, 2688, %s26, [#allocation6], 64, 64, 4
    $region9: #{tpu_custom_call.1} parent=1 // pred_fallthru
      _
    // Predicated region
    $region10: #{tpu_custom_call.1} parent=1 // pred_check
      _
    $region11: #{tpu_custom_call.1} parent=1 // pred_check_branch
      %33 = sbr.rel (0) target = $region13
    $region12: #{tpu_custom_call.1} parent=1 // pred_region
      %34 = dma.done [#allocation3], 128
    $region13: #{tpu_custom_call.1} parent=1 // pred_fallthru
      _
    // Predicated region
    $region14: #{tpu_custom_call.1} parent=1 // pred_check
      _
    $region15: #{tpu_custom_call.1} parent=1 // pred_check_branch
      %36 = sbr.rel (0) target = $region17
    $region16: #{tpu_custom_call.1} parent=1 // pred_region
      %37 = dma.done [#allocation6], 2688
    $region17: #{tpu_custom_call.1} parent=1 // pred_fallthru
      _
    %v39 = vld [vmem:[#allocation2] sm:$0xff]
    %v40 = vpack.c.bf16 %v39, %v39
    %v41 = vld [vmem:[#allocation5] sm:$0xf]
    %v42 = vld [vmem:[#allocation5 + $0x4] sm:$0xf]
    %v43 = vld [vmem:[#allocation5 + $0x8] sm:$0xf]
    %v44 = vld [vmem:[#allocation5 + $0xc] sm:$0xf]
    %v45 = vld [vmem:[#allocation5 + $0x10] sm:$0xf]
    %v46 = vld [vmem:[#allocation5 + $0x14] sm:$0xf]
    %v47 = vld [vmem:[#allocation5 + $0x18] sm:$0xf]
    %v48 = vld [vmem:[#allocation5 + $0x1c] sm:$0xf]
    %v57 = vunpack.c.l.b16 %v41
    %v58 = vunpack.c.l.b16 %v42
    %v59 = vunpack.c.l.b16 %v43
    %v60 = vunpack.c.l.b16 %v44
    %v61 = vunpack.c.l.b16 %v45
    %v62 = vunpack.c.l.b16 %v46
    %v63 = vunpack.c.l.b16 %v47
    %v64 = vunpack.c.l.b16 %v48
    %v65 = vpack.c.b16 %v58, %v57
    %v66 = vpack.c.b16 %v60, %v59
    %v67 = vpack.c.b16 %v62, %v61
    %v68 = vpack.c.b16 %v64, %v63
    %vm73 = vcmask 523264
    %v75 = vsel %vm73, %v40, 0
    %77 = vmatprep.subr.bf16.mxu0 0
    %78 = vmatpush1.bf16.msra.mxu0 0
    %79 = vmatprep.subr.bf16.mxu0 0
    %80 = vmatpush1.bf16.msra.mxu0 0
    %81 = vmatprep.subr.bf16.mxu0 0
    %82 = vmatpush1.bf16.msra.mxu0 0
    %83 = vmatprep.subr.bf16.mxu0 0
    %84 = vmatpush1.bf16.msra.mxu0 0
    %85 = vmatprep.subr.bf16.mxu0 0
    %86 = vmatpush1.bf16.msra.mxu0 %v68
    %87 = vmatprep.subr.bf16.mxu0 0
    %88 = vmatpush1.bf16.msra.mxu0 %v67
    %89 = vmatprep.subr.bf16.mxu0 0
    %90 = vmatpush1.bf16.msra.mxu0 %v66
    %91 = vmatprep.subr.bf16.mxu0 0
    %92 = vmatpush1.bf16.msra.mxu0 %v65
    %93 = vmatprep.subr.bf16.mxu0 0
    %94 = vmatpush2.bf16.msra.mxu0 0
    %95 = vmatprep.subr.bf16.mxu0 0
    %96 = vmatpush2.bf16.msra.mxu0 0
    %97 = vmatprep.subr.bf16.mxu0 0
    %98 = vmatpush2.bf16.msra.mxu0 0
    %99 = vmatprep.subr.bf16.mxu0 0
    %100 = vmatpush2.bf16.msra.mxu0 0
    %101 = vmatprep.subr.bf16.mxu0 0
    %102 = vmatpush2.bf16.msra.mxu0 0
    %103 = vmatprep.subr.bf16.mxu0 0
    %104 = vmatpush2.bf16.msra.mxu0 0
    %105 = vmatprep.subr.bf16.mxu0 0
    %106 = vmatpush2.bf16.msra.mxu0 0
    %107 = vmatprep.subr.bf16.mxu0 0
    %108 = vmatpush2.bf16.msra.mxu0 0
    %109 = vmatprep.mubr.bf16.mxu0 0
    %110 = vmatmul.mubr.bf16.gmra.mxu0 %v75
    %v111 = vpop.f32.mrf.mxu0
    %v112 = vadd.f32 0.0, %v111
    %v113 = vpop.f32.mrf.mxu0
    %v114 = vpop.f32.mrf.mxu0
    %v115 = vpop.f32.mrf.mxu0
    %116 = vdwg.mxu0
    %v117 = vld [vmem:[#allocation5 + $0xa0] sm:$0x1]
    %v118 = vunpack.c.l.bf16 %v117
    %v119 = vrot.slane %v112, 4
    %v120 = vadd.f32 %v112, %v119
    %v121 = vrot.slane %v120, 2
    %v122 = vadd.f32 %v120, %v121
    %v123 = vrot.slane %v122, 1
    %v124 = vadd.f32 %v122, %v123
    %v125 = vrcp.pop 8.0
    %v126 = vmul.f32 %v124, %v125
    %v127 = vsub.f32 %v112, %v126
    %v128 = vmul.f32 %v127, %v127
    %v129 = vrot.slane %v128, 4
    %v130 = vadd.f32 %v128, %v129
    %v131 = vrot.slane %v130, 2
    %v132 = vadd.f32 %v130, %v131
    %v133 = vrot.slane %v132, 1
    %v134 = vadd.f32 %v132, %v133
    %v135 = vmul.f32 %v134, %v125
    %v136 = vadd.f32 %v135, 1e-05
    %v137 = vrsqrt.pop %v136
    %v138 = vmul.f32 %v118, %v137
    %v139 = vlaneseq
    %v140 = vshrl.u32 %v139, 7
    %v141 = vsub.s32 0, %v140
    %v142 = vrot.slane %v138, %v141
    %v143 = vmul.f32 %v127, %v142
    %v144 = vlaneseq
    %v145 = vshrl.u32 %v144, 7
    %v146 = vsub.s32 1, %v145
    %v147 = vrot.slane %v118, %v146
    %v148 = vadd.f32 %v143, %v147
    %v149 = vmax.f32 %v148, 0.0
    %v150 = vpack.c.bf16 %v149, %v149
    %v151 = vld [vmem:[#allocation5 + $0x20] sm:$0xf]
    %v152 = vld [vmem:[#allocation5 + $0x24] sm:$0xf]
    %v153 = vld [vmem:[#allocation5 + $0x28] sm:$0xf]
    %v154 = vld [vmem:[#allocation5 + $0x2c] sm:$0xf]
    %v155 = vld [vmem:[#allocation5 + $0x30] sm:$0xf]
    %v156 = vld [vmem:[#allocation5 + $0x34] sm:$0xf]
    %v157 = vld [vmem:[#allocation5 + $0x38] sm:$0xf]
    %v158 = vld [vmem:[#allocation5 + $0x3c] sm:$0xf]
    %v159 = vld [vmem:[#allocation5 + $0x40] sm:$0xf]
    %v160 = vld [vmem:[#allocation5 + $0x44] sm:$0xf]
    %v161 = vld [vmem:[#allocation5 + $0x48] sm:$0xf]
    %v162 = vld [vmem:[#allocation5 + $0x4c] sm:$0xf]
    %v163 = vld [vmem:[#allocation5 + $0x50] sm:$0xf]
    %v164 = vld [vmem:[#allocation5 + $0x54] sm:$0xf]
    %v165 = vld [vmem:[#allocation5 + $0x58] sm:$0xf]
    %v166 = vld [vmem:[#allocation5 + $0x5c] sm:$0xf]
    %v183 = vunpack.c.l.b16 %v151
    %v184 = vunpack.c.l.b16 %v152
    %v185 = vunpack.c.l.b16 %v153
    %v186 = vunpack.c.l.b16 %v154
    %v187 = vunpack.c.l.b16 %v155
    %v188 = vunpack.c.l.b16 %v156
    %v189 = vunpack.c.l.b16 %v157
    %v190 = vunpack.c.l.b16 %v158
    %v191 = vunpack.c.l.b16 %v159
    %v192 = vunpack.c.l.b16 %v160
    %v193 = vunpack.c.l.b16 %v161
    %v194 = vunpack.c.l.b16 %v162
    %v195 = vunpack.c.l.b16 %v163
    %v196 = vunpack.c.l.b16 %v164
    %v197 = vunpack.c.l.b16 %v165
    %v198 = vunpack.c.l.b16 %v166
    %v199 = vpack.c.b16 %v184, %v183
    %v200 = vpack.c.b16 %v186, %v185
    %v201 = vpack.c.b16 %v188, %v187
    %v202 = vpack.c.b16 %v190, %v189
    %v203 = vpack.c.b16 %v192, %v191
    %v204 = vpack.c.b16 %v194, %v193
    %v205 = vpack.c.b16 %v196, %v195
    %v206 = vpack.c.b16 %v198, %v197
    %215 = vmatprep.subr.bf16.mxu0 0
    %216 = vmatpush1.bf16.msra.mxu0 %v206
    %217 = vmatprep.subr.bf16.mxu0 0
    %218 = vmatpush1.bf16.msra.mxu0 %v205
    %219 = vmatprep.subr.bf16.mxu0 0
    %220 = vmatpush1.bf16.msra.mxu0 %v204
    %221 = vmatprep.subr.bf16.mxu0 0
    %222 = vmatpush1.bf16.msra.mxu0 %v203
    %223 = vmatprep.subr.bf16.mxu0 0
    %224 = vmatpush1.bf16.msra.mxu0 %v202
    %225 = vmatprep.subr.bf16.mxu0 0
    %226 = vmatpush1.bf16.msra.mxu0 %v201
    %227 = vmatprep.subr.bf16.mxu0 0
    %228 = vmatpush1.bf16.msra.mxu0 %v200
    %229 = vmatprep.subr.bf16.mxu0 0
    %230 = vmatpush1.bf16.msra.mxu0 %v199
    %231 = vmatprep.subr.bf16.mxu0 0
    %232 = vmatpush2.bf16.msra.mxu0 0
    %233 = vmatprep.subr.bf16.mxu0 0
    %234 = vmatpush2.bf16.msra.mxu0 0
    %235 = vmatprep.subr.bf16.mxu0 0
    %236 = vmatpush2.bf16.msra.mxu0 0
    %237 = vmatprep.subr.bf16.mxu0 0
    %238 = vmatpush2.bf16.msra.mxu0 0
    %239 = vmatprep.subr.bf16.mxu0 0
    %240 = vmatpush2.bf16.msra.mxu0 0
    %241 = vmatprep.subr.bf16.mxu0 0
    %242 = vmatpush2.bf16.msra.mxu0 0
    %243 = vmatprep.subr.bf16.mxu0 0
    %244 = vmatpush2.bf16.msra.mxu0 0
    %245 = vmatprep.subr.bf16.mxu0 0
    %246 = vmatpush2.bf16.msra.mxu0 0
    %247 = vmatprep.mubr.bf16.mxu0 0
    %248 = vmatmul.mubr.bf16.gmra.mxu0 %v150
    %v249 = vpop.f32.mrf.mxu0
    %v250 = vadd.f32 0.0, %v249
    %v251 = vpop.f32.mrf.mxu0
    %v252 = vpop.f32.mrf.mxu0
    %v253 = vpop.f32.mrf.mxu0
    %254 = vdwg.mxu0
    %v255 = vld [vmem:[#allocation5 + $0xa0] sm:$0x2]
    %v256 = vunpack.c.l.bf16 %v255
    %v257 = vrot.slane %v250, 4
    %v258 = vadd.f32 %v250, %v257
    %v259 = vrot.slane %v258, 2
    %v260 = vadd.f32 %v258, %v259
    %v261 = vrot.slane %v260, 1
    %v262 = vadd.f32 %v260, %v261
    %v263 = vmul.f32 %v262, %v125
    %v264 = vsub.f32 %v250, %v263
    %v265 = vmul.f32 %v264, %v264
    %v266 = vrot.slane %v265, 4
    %v267 = vadd.f32 %v265, %v266
    %v268 = vrot.slane %v267, 2
    %v269 = vadd.f32 %v267, %v268
    %v270 = vrot.slane %v269, 1
    %v271 = vadd.f32 %v269, %v270
    %v272 = vmul.f32 %v271, %v125
    %v273 = vadd.f32 %v272, 1e-05
    %v274 = vrsqrt.pop %v273
    %v275 = vmul.f32 %v256, %v274
    %v276 = vlaneseq
    %v277 = vshrl.u32 %v276, 7
    %v278 = vsub.s32 2, %v277
    %v279 = vrot.slane %v275, %v278
    %v280 = vmul.f32 %v264, %v279
    %v281 = vlaneseq
    %v282 = vshrl.u32 %v281, 7
    %v283 = vsub.s32 3, %v282
    %v284 = vrot.slane %v256, %v283
    %v285 = vadd.f32 %v280, %v284
    %v286 = vmax.f32 %v285, 0.0
    %v287 = vld [vmem:[#allocation5 + $0xa0] sm:$0x4]
    %v288 = vunpack.c.l.bf16 %v287
    %v289 = vpack.c.bf16 %v286, %v286
    %v290 = vld [vmem:[#allocation5 + $0x60] sm:$0xf]
    %v291 = vld [vmem:[#allocation5 + $0x64] sm:$0xf]
    %v292 = vld [vmem:[#allocation5 + $0x68] sm:$0xf]
    %v293 = vld [vmem:[#allocation5 + $0x6c] sm:$0xf]
    %v294 = vld [vmem:[#allocation5 + $0x70] sm:$0xf]
    %v295 = vld [vmem:[#allocation5 + $0x74] sm:$0xf]
    %v296 = vld [vmem:[#allocation5 + $0x78] sm:$0xf]
    %v297 = vld [vmem:[#allocation5 + $0x7c] sm:$0xf]
    %v298 = vld [vmem:[#allocation5 + $0x80] sm:$0xf]
    %v299 = vld [vmem:[#allocation5 + $0x84] sm:$0xf]
    %v300 = vld [vmem:[#allocation5 + $0x88] sm:$0xf]
    %v301 = vld [vmem:[#allocation5 + $0x8c] sm:$0xf]
    %v302 = vld [vmem:[#allocation5 + $0x90] sm:$0xf]
    %v303 = vld [vmem:[#allocation5 + $0x94] sm:$0xf]
    %v304 = vld [vmem:[#allocation5 + $0x98] sm:$0xf]
    %v305 = vld [vmem:[#allocation5 + $0x9c] sm:$0xf]
    %v306 = vlaneseq
    %v307 = vshrl.u32 %v306, 7
    %v308 = vsub.s32 4, %v307
    %v309 = vrot.slane %v288, %v308
    %v326 = vunpack.c.l.b16 %v290
    %v327 = vunpack.c.l.b16 %v291
    %v328 = vunpack.c.l.b16 %v292
    %v329 = vunpack.c.l.b16 %v293
    %v330 = vunpack.c.l.b16 %v294
    %v331 = vunpack.c.l.b16 %v295
    %v332 = vunpack.c.l.b16 %v296
    %v333 = vunpack.c.l.b16 %v297
    %v334 = vunpack.c.l.b16 %v298
    %v335 = vunpack.c.l.b16 %v299
    %v336 = vunpack.c.l.b16 %v300
    %v337 = vunpack.c.l.b16 %v301
    %v338 = vunpack.c.l.b16 %v302
    %v339 = vunpack.c.l.b16 %v303
    %v340 = vunpack.c.l.b16 %v304
    %v341 = vunpack.c.l.b16 %v305
    %v342 = vpack.c.b16 %v327, %v326
    %v343 = vpack.c.b16 %v329, %v328
    %v344 = vpack.c.b16 %v331, %v330
    %v345 = vpack.c.b16 %v333, %v332
    %v346 = vpack.c.b16 %v335, %v334
    %v347 = vpack.c.b16 %v337, %v336
    %v348 = vpack.c.b16 %v339, %v338
    %v349 = vpack.c.b16 %v341, %v340
    %358 = vmatprep.subr.bf16.mxu0 0
    %359 = vmatpush1.bf16.msra.mxu0 %v349
    %360 = vmatprep.subr.bf16.mxu0 0
    %361 = vmatpush1.bf16.msra.mxu0 %v348
    %362 = vmatprep.subr.bf16.mxu0 0
    %363 = vmatpush1.bf16.msra.mxu0 %v347
    %364 = vmatprep.subr.bf16.mxu0 0
    %365 = vmatpush1.bf16.msra.mxu0 %v346
    %366 = vmatprep.subr.bf16.mxu0 0
    %367 = vmatpush1.bf16.msra.mxu0 %v345
    %368 = vmatprep.subr.bf16.mxu0 0
    %369 = vmatpush1.bf16.msra.mxu0 %v344
    %370 = vmatprep.subr.bf16.mxu0 0
    %371 = vmatpush1.bf16.msra.mxu0 %v343
    %372 = vmatprep.subr.bf16.mxu0 0
    %373 = vmatpush1.bf16.msra.mxu0 %v342
    %374 = vmatprep.subr.bf16.mxu0 0
    %375 = vmatpush2.bf16.msra.mxu0 0
    %376 = vmatprep.subr.bf16.mxu0 0
    %377 = vmatpush2.bf16.msra.mxu0 0
    %378 = vmatprep.subr.bf16.mxu0 0
    %379 = vmatpush2.bf16.msra.mxu0 0
    %380 = vmatprep.subr.bf16.mxu0 0
    %381 = vmatpush2.bf16.msra.mxu0 0
    %382 = vmatprep.subr.bf16.mxu0 0
    %383 = vmatpush2.bf16.msra.mxu0 0
    %384 = vmatprep.subr.bf16.mxu0 0
    %385 = vmatpush2.bf16.msra.mxu0 0
    %386 = vmatprep.subr.bf16.mxu0 0
    %387 = vmatpush2.bf16.msra.mxu0 0
    %388 = vmatprep.subr.bf16.mxu0 0
    %389 = vmatpush2.bf16.msra.mxu0 0
    %390 = vmatprep.mubr.bf16.mxu0 0
    %391 = vmatmul.mubr.bf16.gmra.mxu0 %v289
    %v392 = vpop.f32.mrf.mxu0
    %v393 = vadd.f32 %v309, %v392
    %v394 = vpop.f32.mrf.mxu0
    %v395 = vpop.f32.mrf.mxu0
    %v396 = vpop.f32.mrf.mxu0
    %397 = vdwg.mxu0
    %398 = vst [vmem:[#allocation7] sm:$0xff] %v393
    // Predicated region
    $region18: #{tpu_custom_call.1} parent=1 // pred_check
      _
    $region19: #{tpu_custom_call.1} parent=1 // pred_check_branch
      %400 = sbr.rel (0) target = $region21
    $region20: #{tpu_custom_call.1} parent=1 // pred_region
      %s402 = ssub.s32 128, 128
      %403 = vsyncadd [#allocation4], %s402
      %s405 = sshll.u32 [#allocation7], 4
      %s406 = int_to_ptr.vmem [resolvable:$true] %s405
      %408 = dma.vmem_to_hbm [thread:$0]  %s406, 128, %s2, [#allocation4]
    $region21: #{tpu_custom_call.1} parent=1 // pred_fallthru
      _
    // Predicated region
    $region22: #{tpu_custom_call.1} parent=1 // pred_check
      _
    $region23: #{tpu_custom_call.1} parent=1 // pred_check_branch
      %410 = sbr.rel (0) target = $region25
    $region24: #{tpu_custom_call.1} parent=1 // pred_region
      %411 = dma.done [#allocation4], 128
    $region25: #{tpu_custom_call.1} parent=1 // pred_fallthru
      _
    %412 = vsyncpa [#allocation3], 1
    %413 = vsyncpa [#allocation6], 1
    %414 = vsyncpa [#allocation4], 1

</llo_original>
